<compile_context>
chip_gen: v5e
topology: v5e:2x2
jax: 0.10.0
libtpu: 0.0.40
codegen_flags: <defaults>
</compile_context>

<pallas_src>
import functools

import jax
import jax.numpy as jnp
from jax.experimental import pallas as pl
from jax.experimental.pallas import tpu as pltpu


_TILE_N_MAX = 1024  # rows per grid step (sweepable 512-2048; 1024 is safe everywhere)


def _round_up(x, m):
    return ((x + m - 1) // m) * m


def _atloss_kernel(logits_ref, labels_ref, w_ref, sum_ref, cnt_ref):
    """Per-tile adaptive-threshold loss + fused weighted reduction."""
    i = pl.program_id(0)

    @pl.when(i == 0)
    def _():
        sum_ref[...] = jnp.zeros_like(sum_ref)
        cnt_ref[...] = jnp.zeros_like(cnt_ref)

    logits = logits_ref[...].astype(jnp.float32)   # (T, C)
    labels = labels_ref[...].astype(jnp.float32)   # (T, C)
    w = w_ref[...].astype(jnp.float32)             # (T, 1) per-row weight

    col = jax.lax.broadcasted_iota(jnp.int32, logits.shape, 1)
    is_th = col == 0                               # threshold ("TH") class column
    labels = jnp.where(is_th, 0.0, labels)         # labels[:, 0] = 0
    pos = labels > 0.0

    neg_big = jnp.float32(-1e30)

    # loss1: log_softmax restricted to {TH col} U {positive-label cols},
    #        reduced against labels (positive columns only).
    logit1 = jnp.where(jnp.logical_or(pos, is_th), logits, neg_big)
    m1 = jnp.max(logit1, axis=-1, keepdims=True)
    lse1 = jnp.log(jnp.sum(jnp.exp(logit1 - m1), axis=-1, keepdims=True)) + m1
    loss1 = -jnp.sum((logits - lse1) * labels, axis=-1, keepdims=True)

    # loss2: log_softmax restricted to {TH col} U {negative cols}, evaluated at
    #        the TH column only  ->  logsumexp(logit2) - logits[:, 0].
    logit2 = jnp.where(pos, neg_big, logits)
    m2 = jnp.max(logit2, axis=-1, keepdims=True)
    lse2 = jnp.log(jnp.sum(jnp.exp(logit2 - m2), axis=-1, keepdims=True)) + m2
    loss2 = lse2 - logits[:, 0:1]

    per_row = loss1 + loss2                        # (T, 1)

    sum_ref[...] += jnp.sum(per_row * w, keepdims=True)   # (1, 1)
    cnt_ref[...] += jnp.sum(w, keepdims=True)              # (1, 1)


def _fused_loss(logits, labels, weight):
    """Returns (weighted_sum, weight_count), each shaped (1, 1) float32."""
    n, c = logits.shape
    tile_n = min(_TILE_N_MAX, _round_up(n, 8))
    n_pad = _round_up(n, tile_n)
    if n_pad != n:
        pad = n_pad - n
        # Padded rows carry weight 0, so they contribute nothing to either sum.
        logits = jnp.pad(logits, ((0, pad), (0, 0)))
        labels = jnp.pad(labels, ((0, pad), (0, 0)))
        weight = jnp.pad(weight, ((0, pad), (0, 0)))

    grid = (n_pad // tile_n,)
    return pl.pallas_call(
        _atloss_kernel,
        out_shape=(
            jax.ShapeDtypeStruct((1, 1), jnp.float32),
            jax.ShapeDtypeStruct((1, 1), jnp.float32),
        ),
        grid=grid,
        in_specs=[
            pl.BlockSpec((tile_n, c), lambda i: (i, 0)),
            pl.BlockSpec((tile_n, c), lambda i: (i, 0)),
            pl.BlockSpec((tile_n, 1), lambda i: (i, 0)),
        ],
        out_specs=(
            pl.BlockSpec((1, 1), lambda i: (0, 0)),
            pl.BlockSpec((1, 1), lambda i: (0, 0)),
        ),
        compiler_params=pltpu.CompilerParams(
            dimension_semantics=("arbitrary",),   # reduction axis (resident scalars)
        ),
    )(logits, labels, weight)


@functools.partial(jax.jit, static_argnames=("is_dwie",))
def at_loss(logits, labels, entity_mask, is_dwie):
    """ATLoss.forward. logits/labels: (N, C); entity_mask: (E,), N == E*E when is_dwie."""
    n, _ = logits.shape
    if is_dwie:
        em = entity_mask.astype(jnp.float32)                     # (E,)
        weight = (em[:, None] * em[None, :]).reshape(n, 1)       # (N, 1) pair_valid
    else:
        weight = jnp.ones((n, 1), jnp.float32)                   # mean == sum / N
    loss_sum, cnt = _fused_loss(logits, labels, weight)
    return loss_sum[0, 0] / jnp.maximum(cnt[0, 0], 1.0)


def _at_loss_ref(logits, labels, entity_mask, is_dwie):
    """Pure-JAX reference mirroring the PyTorch module (for the self-check)."""
    logits = logits.astype(jnp.float32)
    labels = labels.astype(jnp.float32)
    th_label = jnp.zeros_like(labels).at[:, 0].set(1.0)
    labels = labels.at[:, 0].set(0.0)
    p_mask = labels + th_label
    n_mask = 1.0 - labels
    logit1 = logits - (1.0 - p_mask) * 1e30
    loss1 = -jnp.sum(jax.nn.log_softmax(logit1, axis=-1) * labels, axis=-1)
    logit2 = logits - (1.0 - n_mask) * 1e30
    loss2 = -jnp.sum(jax.nn.log_softmax(logit2, axis=-1) * th_label, axis=-1)
    loss = loss1 + loss2
    if is_dwie:
        em = entity_mask.astype(jnp.float32)
        pv = (em[:, None] * em[None, :]).reshape(-1)
        return jnp.sum(loss * pv) / jnp.sum(pv)
    return jnp.mean(loss)


if __name__ == "__main__":
    key = jax.random.PRNGKey(0)
    k1, k2, k3 = jax.random.split(key, 3)

    E = 4                 # number of entities (DWIE branch) -> N = E*E pairs
    N = E * E             # 16 relation pairs
    C = 97                # relation classes incl. TH class 0 (DocRED-like, non-128 lanes)

    logits = jax.random.normal(k1, (N, C), dtype=jnp.float32)
    labels = (jax.random.uniform(k2, (N, C)) < 0.3).astype(jnp.float32)
    entity_mask = (jax.random.uniform(k3, (E,)) < 0.8).astype(jnp.float32)

    loss_mean = at_loss(logits, labels, entity_mask, is_dwie=False)
    loss_dwie = at_loss(logits, labels, entity_mask, is_dwie=True)
    jax.block_until_ready((loss_mean, loss_dwie))

    ref_mean = _at_loss_ref(logits, labels, entity_mask, is_dwie=False)
    ref_dwie = _at_loss_ref(logits, labels, entity_mask, is_dwie=True)
    assert jnp.allclose(loss_mean, ref_mean, rtol=1e-4, atol=1e-4), (loss_mean, ref_mean)
    assert jnp.allclose(loss_dwie, ref_dwie, rtol=1e-4, atol=1e-4), (loss_dwie, ref_dwie)

    # TODO(synk): ATLoss.get_label (inference-time top-k thresholding) is not part of
    # the forward pass and is not implemented here.
    print("KERNEL_OK")
</pallas_src>

<mosaic_0001>
module attributes {stable_mosaic.version = 11 : i64} {
  func.func @_atloss_kernel(%arg0: i32, %arg1: memref<16x97xf32, #tpu.memory_space<vmem>>, %arg2: memref<16x97xf32, #tpu.memory_space<vmem>>, %arg3: memref<16x1xf32, #tpu.memory_space<vmem>>, %arg4: memref<1x1xf32, #tpu.memory_space<vmem>>, %arg5: memref<1x1xf32, #tpu.memory_space<vmem>>) attributes {dimension_semantics = [#tpu.dimension_semantics<arbitrary>], iteration_bounds = array<i64: 1>, scalar_prefetch = 0 : i64, scratch_operands = 0 : i64, tpu.core_type = #tpu.core_type<tc>, window_params = [{transform_indices = @transform_0, window_bounds = array<i64: 16, 97>}, {transform_indices = @transform_1, window_bounds = array<i64: 16, 97>}, {transform_indices = @transform_2, window_bounds = array<i64: 16, 1>}, {pipeline_mode = #tpu.pipeline_mode<synchronous>, transform_indices = @transform_3, window_bounds = array<i64: 1, 1>}, {pipeline_mode = #tpu.pipeline_mode<synchronous>, transform_indices = @transform_4, window_bounds = array<i64: 1, 1>}]} {
    %c0_i32 = arith.constant 0 : i32
    %0 = arith.cmpi eq, %arg0, %c0_i32 : i32
    %1 = arith.extui %0 : i1 to i32
    %c0_i32_0 = arith.constant 0 : i32
    %2 = arith.cmpi ne, %1, %c0_i32_0 : i32
    scf.if %2 {
      %cst_26 = arith.constant 0.000000e+00 : f32
      %63 = vector.broadcast %cst_26 : f32 to vector<1x1xf32>
      %c0_27 = arith.constant 0 : index
      %c0_28 = arith.constant 0 : index
      %64 = vector.load %arg4[%c0_27, %c0_28] : memref<1x1xf32, #tpu.memory_space<vmem>>, vector<1x1xf32>
      tpu.vector_store %arg4[%c0_27, %c0_28], %63 {strides = array<i32>} : memref<1x1xf32, #tpu.memory_space<vmem>>, vector<1x1xf32>,
      %cst_29 = arith.constant 0.000000e+00 : f32
      %65 = vector.broadcast %cst_29 : f32 to vector<1x1xf32>
      %c0_30 = arith.constant 0 : index
      %c0_31 = arith.constant 0 : index
      %66 = vector.load %arg5[%c0_30, %c0_31] : memref<1x1xf32, #tpu.memory_space<vmem>>, vector<1x1xf32>
      tpu.vector_store %arg5[%c0_30, %c0_31], %65 {strides = array<i32>} : memref<1x1xf32, #tpu.memory_space<vmem>>, vector<1x1xf32>,
    } else {
    }
    %c0 = arith.constant 0 : index
    %c0_1 = arith.constant 0 : index
    %3 = vector.load %arg1[%c0, %c0_1] : memref<16x97xf32, #tpu.memory_space<vmem>>, vector<16x97xf32>
    %c0_2 = arith.constant 0 : index
    %c0_3 = arith.constant 0 : index
    %4 = vector.load %arg2[%c0_2, %c0_3] : memref<16x97xf32, #tpu.memory_space<vmem>>, vector<16x97xf32>
    %c0_4 = arith.constant 0 : index
    %c0_5 = arith.constant 0 : index
    %5 = vector.load %arg3[%c0_4, %c0_5] : memref<16x1xf32, #tpu.memory_space<vmem>>, vector<16x1xf32>
    %6 = tpu.iota {dimensions = array<i32: 1>} : vector<16x97xi32>
    %c0_i32_6 = arith.constant 0 : i32
    %7 = vector.broadcast %c0_i32_6 : i32 to vector<16x97xi32>
    %8 = arith.cmpi eq, %6, %7 : vector<16x97xi32>
    %cst = arith.constant 0.000000e+00 : f32
    %9 = vector.broadcast %cst : f32 to vector<16x97xf32>
    %10 = arith.select %8, %9, %4 : vector<16x97xi1>, vector<16x97xf32>
    %cst_7 = arith.constant 0.000000e+00 : f32
    %11 = vector.broadcast %cst_7 : f32 to vector<16x97xf32>
    %12 = arith.cmpf ogt, %10, %11 : vector<16x97xf32>
    %13 = arith.ori %12, %8 : vector<16x97xi1>
    %cst_8 = arith.constant -1.000000e+30 : f32
    %14 = vector.broadcast %cst_8 : f32 to vector<16x97xf32>
    %15 = arith.select %13, %3, %14 : vector<16x97xi1>, vector<16x97xf32>
    %cst_9 = arith.constant dense<0xFF800000> : vector<16xf32>
    %16 = vector.multi_reduction <maximumf>, %15, %cst_9 [1] : vector<16x97xf32> to vector<16xf32>
    %17 = vector.shape_cast %16 : vector<16xf32> to vector<16x1xf32>
    %18 = vector.broadcast %17 : vector<16x1xf32> to vector<16x97xf32>
    %19 = arith.subf %15, %18 : vector<16x97xf32>
    %20 = math.exp %19 : vector<16x97xf32>
    %cst_10 = arith.constant dense<0.000000e+00> : vector<16xf32>
    %21 = vector.multi_reduction <add>, %20, %cst_10 [1] : vector<16x97xf32> to vector<16xf32>
    %22 = vector.shape_cast %21 : vector<16xf32> to vector<16x1xf32>
    %23 = math.log %22 : vector<16x1xf32>
    %24 = arith.addf %23, %17 : vector<16x1xf32>
    %25 = vector.broadcast %24 : vector<16x1xf32> to vector<16x97xf32>
    %26 = arith.subf %3, %25 : vector<16x97xf32>
    %27 = arith.mulf %26, %10 : vector<16x97xf32>
    %cst_11 = arith.constant dense<0.000000e+00> : vector<16xf32>
    %28 = vector.multi_reduction <add>, %27, %cst_11 [1] : vector<16x97xf32> to vector<16xf32>
    %29 = vector.shape_cast %28 : vector<16xf32> to vector<16x1xf32>
    %cst_12 = arith.constant 0.000000e+00 : f32
    %30 = vector.broadcast %cst_12 : f32 to vector<16x1xf32>
    %31 = arith.subf %30, %29 : vector<16x1xf32>
    %cst_13 = arith.constant -1.000000e+30 : f32
    %32 = vector.broadcast %cst_13 : f32 to vector<16x97xf32>
    %33 = arith.select %12, %32, %3 : vector<16x97xi1>, vector<16x97xf32>
    %cst_14 = arith.constant dense<0xFF800000> : vector<16xf32>
    %34 = vector.multi_reduction <maximumf>, %33, %cst_14 [1] : vector<16x97xf32> to vector<16xf32>
    %35 = vector.shape_cast %34 : vector<16xf32> to vector<16x1xf32>
    %36 = vector.broadcast %35 : vector<16x1xf32> to vector<16x97xf32>
    %37 = arith.subf %33, %36 : vector<16x97xf32>
    %38 = math.exp %37 : vector<16x97xf32>
    %cst_15 = arith.constant dense<0.000000e+00> : vector<16xf32>
    %39 = vector.multi_reduction <add>, %38, %cst_15 [1] : vector<16x97xf32> to vector<16xf32>
    %40 = vector.shape_cast %39 : vector<16xf32> to vector<16x1xf32>
    %41 = math.log %40 : vector<16x1xf32>
    %42 = arith.addf %41, %35 : vector<16x1xf32>
    %43 = vector.extract_strided_slice %3 {offsets = [0, 0], sizes = [16, 1], strides = [1, 1]} : vector<16x97xf32> to vector<16x1xf32>
    %44 = arith.subf %42, %43 : vector<16x1xf32>
    %45 = arith.addf %31, %44 : vector<16x1xf32>
    %c0_16 = arith.constant 0 : index
    %c0_17 = arith.constant 0 : index
    %46 = vector.load %arg4[%c0_16, %c0_17] : memref<1x1xf32, #tpu.memory_space<vmem>>, vector<1x1xf32>
    %47 = arith.mulf %45, %5 : vector<16x1xf32>
    %48 = vector.shape_cast %47 : vector<16x1xf32> to vector<1x16x1xf32>
    %cst_18 = arith.constant dense<0.000000e+00> : vector<1xf32>
    %49 = vector.multi_reduction <add>, %48, %cst_18 [1, 2] : vector<1x16x1xf32> to vector<1xf32>
    %50 = vector.shape_cast %49 : vector<1xf32> to vector<1x1x1xf32>
    %51 = vector.extract %50[0, 0, 0] : f32 from vector<1x1x1xf32>
    %52 = vector.broadcast %51 : f32 to vector<1x1xf32>
    %53 = arith.addf %46, %52 : vector<1x1xf32>
    %c0_19 = arith.constant 0 : index
    %c0_20 = arith.constant 0 : index
    %54 = vector.load %arg4[%c0_19, %c0_20] : memref<1x1xf32, #tpu.memory_space<vmem>>, vector<1x1xf32>
    tpu.vector_store %arg4[%c0_19, %c0_20], %53 {strides = array<i32>} : memref<1x1xf32, #tpu.memory_space<vmem>>, vector<1x1xf32>,
    %c0_21 = arith.constant 0 : index
    %c0_22 = arith.constant 0 : index
    %55 = vector.load %arg5[%c0_21, %c0_22] : memref<1x1xf32, #tpu.memory_space<vmem>>, vector<1x1xf32>
    %56 = vector.shape_cast %5 : vector<16x1xf32> to vector<1x16x1xf32>
    %cst_23 = arith.constant dense<0.000000e+00> : vector<1xf32>
    %57 = vector.multi_reduction <add>, %56, %cst_23 [1, 2] : vector<1x16x1xf32> to vector<1xf32>
    %58 = vector.shape_cast %57 : vector<1xf32> to vector<1x1x1xf32>
    %59 = vector.extract %58[0, 0, 0] : f32 from vector<1x1x1xf32>
    %60 = vector.broadcast %59 : f32 to vector<1x1xf32>
    %61 = arith.addf %55, %60 : vector<1x1xf32>
    %c0_24 = arith.constant 0 : index
    %c0_25 = arith.constant 0 : index
    %62 = vector.load %arg5[%c0_24, %c0_25] : memref<1x1xf32, #tpu.memory_space<vmem>>, vector<1x1xf32>
    tpu.vector_store %arg5[%c0_24, %c0_25], %61 {strides = array<i32>} : memref<1x1xf32, #tpu.memory_space<vmem>>, vector<1x1xf32>,
    return
  }
  func.func @transform_0(%arg0: i32) -> (i32, i32) {
    %c0_i32 = arith.constant 0 : i32
    %c0_i32_0 = arith.constant 0 : i32
    return %arg0, %c0_i32 : i32, i32
  }
  func.func @transform_1(%arg0: i32) -> (i32, i32) {
    %c0_i32 = arith.constant 0 : i32
    %c0_i32_0 = arith.constant 0 : i32
    return %arg0, %c0_i32 : i32, i32
  }
  func.func @transform_2(%arg0: i32) -> (i32, i32) {
    %c0_i32 = arith.constant 0 : i32
    %c0_i32_0 = arith.constant 0 : i32
    return %arg0, %c0_i32 : i32, i32
  }
  func.func @transform_3(%arg0: i32) -> (i32, i32) {
    %c0_i32 = arith.constant 0 : i32
    %c0_i32_0 = arith.constant 0 : i32
    %c0_i32_1 = arith.constant 0 : i32
    return %c0_i32, %c0_i32_0 : i32, i32
  }
  func.func @transform_4(%arg0: i32) -> (i32, i32) {
    %c0_i32 = arith.constant 0 : i32
    %c0_i32_0 = arith.constant 0 : i32
    %c0_i32_1 = arith.constant 0 : i32
    return %c0_i32, %c0_i32_0 : i32, i32
  }
}

</mosaic_0001>

<llo_original>
// kernel: at_loss.1
$region0: #{at_loss.1}
  #allocation0 [shape = 'u32[]', space=smem, size = 0x4, offset = 0x4, fixed_abs, tag = 'smem constant byte address 0x4 - core index']
  #allocation1 [shape = 'u32[72,128]{1,0:T(1,128)}', space=vmem, size = 0x9000, scoped, tag = 'internal scratch']
  %s0 = inlined_call_operand.vmem [shape: f32[16,97], index: 0, kind: input, shape index: {}]
  %s1 = inlined_call_operand.hbm [shape: f32[16,97], index: 1, kind: input, shape index: {}]
  %s2 = inlined_call_operand.vmem [shape: f32[16,1], index: 2, kind: input, shape index: {}]
  %s3 = inlined_call_operand.hbm [shape: f32[1,1], index: 3, kind: output, shape index: {0}]
  %s4 = inlined_call_operand.hbm [shape: f32[1,1], index: 4, kind: output, shape index: {1}]
  %5 = xla_tuple %s3, %s4
  %s6 = sld [smem:[#allocation0]]
  $region38: #{at_loss.1} parent=0
    _
  %s8 = ssub.s32 1, %s6
  %s9 = scalar_select 0, %s8, %s6
  $region1: #{at_loss.1} parent=0
    #allocation2 [shape = 'u8[8192]{0}', space=vmem, size = 0x2000, scoped, tag = 'input window, operand 1, single buffered']
    #allocation3 [shape = 's32[1]{0}', space=sflag, size = 0x4, scoped, tag = 'scoped memory for at_loss.1']
    #allocation4 [shape = 's32[1]{0}', space=sflag, size = 0x4, scoped, tag = 'scoped memory for at_loss.1']
    #allocation5 [shape = 'u8[512]{0}', space=vmem, size = 0x400, scoped, tag = 'output window, operand 0, single buffered']
    #allocation6 [shape = 'u8[512]{0}', space=vmem, size = 0x400, scoped, tag = 'output window, operand 1, single buffered']
    #allocation7 [shape = 's32[1]{0}', space=sflag, size = 0x4, scoped, tag = 'scoped memory for at_loss.1']
    %10 = vsyncpa [#allocation3], 0
    %11 = vsyncpa [#allocation4], 0
    %12 = vsyncpa [#allocation7], 0
    // Predicated region
    $region2: #{at_loss.1} parent=1 // pred_check
      _
    $region3: #{at_loss.1} parent=1 // pred_check_branch
      %14 = sbr.rel (0) target = $region5
    $region4: #{at_loss.1} parent=1 // pred_region
      _
    $region5: #{at_loss.1} parent=1 // pred_fallthru
      _
    // Predicated region
    $region6: #{at_loss.1} parent=1 // pred_check
      _
    $region7: #{at_loss.1} parent=1 // pred_check_branch
      %16 = sbr.rel (0) target = $region9
    $region8: #{at_loss.1} parent=1 // pred_region
      %18 = vsyncadd [#allocation3], 0
      %s19 = sshll.u32 %s1, 4
      %s20 = int_to_ptr.hbm [resolvable:$true] %s19
      %s21 = sshll.u32 [#allocation2], 4
      %s22 = int_to_ptr.vmem [resolvable:$true] %s21
      %27 = dma.hbm_to_vmem [thread:$0]  %s20, 256, %s22, [#allocation3], 128, 128, 8
    $region9: #{at_loss.1} parent=1 // pred_fallthru
      _
    // Predicated region
    $region10: #{at_loss.1} parent=1 // pred_check
      _
    $region11: #{at_loss.1} parent=1 // pred_check_branch
      %29 = sbr.rel (0) target = $region13
    $region12: #{at_loss.1} parent=1 // pred_region
      _
    $region13: #{at_loss.1} parent=1 // pred_fallthru
      _
    // Predicated region
    $region14: #{at_loss.1} parent=1 // pred_check
      _
    $region15: #{at_loss.1} parent=1 // pred_check_branch
      %31 = sbr.rel (0) target = $region17
    $region16: #{at_loss.1} parent=1 // pred_region
      %33 = dma.done [#allocation3], 256
    $region17: #{at_loss.1} parent=1 // pred_fallthru
      _
    %p34 = scmp.eq.s32.totalorder 0, 0
    // Predicated region
    $region18: #{at_loss.1} parent=1 // pred_check
      %p35 = pneg %p34
    $region19: #{at_loss.1} parent=1 // pred_check_branch
      %37 = sbr.rel (%p35) target = $region21
    $region20: #{at_loss.1} parent=1 // pred_region
      %vm38 = vcmask 0
      %39 = vst.msk [vmem:[#allocation5] sm:$0x1] %vm38, 0.0
      %40 = vst.msk [vmem:[#allocation6] sm:$0x1] %vm38, 0.0
    $region21: #{at_loss.1} parent=1 // pred_fallthru
      _
    %v41 = vld [vmem:[%s0] sm:$0xff]
    %v42 = vld [vmem:[%s0 + $0x8] sm:$0xff]
    %v43 = vld [vmem:[#allocation2] sm:$0xff]
    %v44 = vld [vmem:[#allocation2 + $0x8] sm:$0xff]
    %v45 = vld [vmem:[%s2] sm:$0xff]
    %v46 = vld [vmem:[%s2 + $0x8] sm:$0xff]
    %v47 = vlaneseq
    %v48 = vand.u32 %v47, 127
    %vm49 = vcmp.eq.s32.totalorder %v48, 0
    %v50 = vsel %vm49, 0.0, %v43
    %v51 = vsel %vm49, 0.0, %v44
    %vm52 = vcmp.gt.f32.partialorder %v50, 0.0
    %vm53 = vcmp.gt.f32.partialorder %v51, 0.0
    %vm54 = vmor %vm52, %vm49
    %vm55 = vmor %vm53, %vm49
    %v56 = vsel %vm54, %v41, -1e+30
    %v57 = vsel %vm55, %v42, -1e+30
    %vm58 = vcmask 793600
    %v59 = vsel %vm58, %v56, -inf
    %60 = vmax.xlane.f32.xlu0 %v59
    %v61 = vpop.xlane.xlu0 %60
    %v62 = vsel %vm58, %v57, -inf
    %63 = vmax.xlane.f32.xlu0 %v62
    %v64 = vpop.xlane.xlu0 %63
    %v65 = vsub.f32 %v56, %v61
    %v66 = vsub.f32 %v57, %v64
    %v67 = vmul.f32 %v65, 1.442695
    %v68 = vpow.pop %v67
    %v69 = vmul.f32 %v66, 1.442695
    %v70 = vpow.pop %v69
    %v71 = vsel %vm58, %v68, 0.0
    %72 = vadd.xlane.f32.xlu0 %v71
    %v73 = vpop.xlane.xlu0 %72
    %v74 = vsel %vm58, %v70, 0.0
    %75 = vadd.xlane.f32.xlu0 %v74
    %v76 = vpop.xlane.xlu0 %75
    %v77 = vlog2.pop %v73
    %v78 = vmul.f32 %v77, 0.6931472
    %v79 = vlog2.pop %v76
    %v80 = vmul.f32 %v79, 0.6931472
    %v81 = vadd.f32 %v78, %v61
    %v82 = vadd.f32 %v80, %v64
    %v83 = vsub.f32 %v41, %v81
    %v84 = vsub.f32 %v42, %v82
    %v85 = vmul.f32 %v83, %v50
    %v86 = vmul.f32 %v84, %v51
    %v87 = vsel %vm58, %v85, 0.0
    %88 = vadd.xlane.f32.xlu0 %v87
    %v89 = vpop.xlane.xlu0 %88
    %v90 = vsel %vm58, %v86, 0.0
    %91 = vadd.xlane.f32.xlu0 %v90
    %v92 = vpop.xlane.xlu0 %91
    %v93 = vsub.f32 0.0, %v89
    %v94 = vsub.f32 0.0, %v92
    %v95 = vsel %vm52, -1e+30, %v41
    %v96 = vsel %vm53, -1e+30, %v42
    %v97 = vsel %vm58, %v95, -inf
    %98 = vmax.xlane.f32.xlu0 %v97
    %v99 = vpop.xlane.xlu0 %98
    %v100 = vsel %vm58, %v96, -inf
    %101 = vmax.xlane.f32.xlu0 %v100
    %v102 = vpop.xlane.xlu0 %101
    %v103 = vsub.f32 %v95, %v99
    %v104 = vsub.f32 %v96, %v102
    %v105 = vmul.f32 %v103, 1.442695
    %v106 = vpow.pop %v105
    %v107 = vmul.f32 %v104, 1.442695
    %v108 = vpow.pop %v107
    %v109 = vsel %vm58, %v106, 0.0
    %110 = vadd.xlane.f32.xlu0 %v109
    %v111 = vpop.xlane.xlu0 %110
    %v112 = vsel %vm58, %v108, 0.0
    %113 = vadd.xlane.f32.xlu0 %v112
    %v114 = vpop.xlane.xlu0 %113
    %v115 = vlog2.pop %v111
    %v116 = vmul.f32 %v115, 0.6931472
    %v117 = vlog2.pop %v114
    %v118 = vmul.f32 %v117, 0.6931472
    %v119 = vadd.f32 %v116, %v99
    %v120 = vadd.f32 %v118, %v102
    %v121 = vsub.f32 %v119, %v41
    %v122 = vsub.f32 %v120, %v42
    %v123 = vadd.f32 %v93, %v121
    %v124 = vadd.f32 %v94, %v122
    %v125 = vld [vmem:[#allocation5] sm:$0x1]
    %v126 = vmul.f32 %v123, %v45
    %v127 = vmul.f32 %v124, %v46
    %vm128 = vcmask 7168
    %v129 = vsel %vm128, %v126, 0.0
    %v130 = vsel %vm128, %v127, 0.0
    %v131 = vadd.f32 %v129, %v130
    %132 = vadd.xlane.f32.xlu0 %v131
    %v133 = vpop.xlane.xlu0 %132
    %v134 = vrot.slane %v133, 4
    %v135 = vadd.f32 %v133, %v134
    %v136 = vrot.slane %v135, 2
    %v137 = vadd.f32 %v135, %v136
    %v138 = vrot.slane %v137, 1
    %v139 = vadd.f32 %v137, %v138
    %s140 = vtos %v139
    %v141 = vstv %s140
    %v142 = vadd.f32 %v125, %v141
    %vm143 = vcmask 0
    %144 = vst.msk [vmem:[#allocation5] sm:$0x1] %vm143, %v142
    %v145 = vld [vmem:[#allocation6] sm:$0x1]
    %v146 = vsel %vm128, %v45, 0.0
    %v147 = vsel %vm128, %v46, 0.0
    %v148 = vadd.f32 %v146, %v147
    %149 = vadd.xlane.f32.xlu0 %v148
    %v150 = vpop.xlane.xlu0 %149
    %v151 = vrot.slane %v150, 4
    %v152 = vadd.f32 %v150, %v151
    %v153 = vrot.slane %v152, 2
    %v154 = vadd.f32 %v152, %v153
    %v155 = vrot.slane %v154, 1
    %v156 = vadd.f32 %v154, %v155
    %s157 = vtos %v156
    %v158 = vstv %s157
    %v159 = vadd.f32 %v145, %v158
    %160 = vst.msk [vmem:[#allocation6] sm:$0x1] %vm143, %v159
    // Predicated region
    $region22: #{at_loss.1} parent=1 // pred_check
      _
    $region23: #{at_loss.1} parent=1 // pred_check_branch
      %162 = sbr.rel (0) target = $region25
    $region24: #{at_loss.1} parent=1 // pred_region
      %164 = vsyncadd [#allocation4], 0
      %s166 = sshll.u32 [#allocation5], 4
      %s167 = int_to_ptr.vmem [resolvable:$true] %s166
      %s168 = sshll.u32 %s3, 4
      %s169 = int_to_ptr.hbm [resolvable:$true] %s168
      %171 = dma.vmem_to_hbm [thread:$0]  %s167, 16, %s169, [#allocation4]
    $region25: #{at_loss.1} parent=1 // pred_fallthru
      _
    // Predicated region
    $region26: #{at_loss.1} parent=1 // pred_check
      _
    $region27: #{at_loss.1} parent=1 // pred_check_branch
      %173 = sbr.rel (0) target = $region29
    $region28: #{at_loss.1} parent=1 // pred_region
      %175 = vsyncadd [#allocation7], 0
      %s177 = sshll.u32 [#allocation6], 4
      %s178 = int_to_ptr.vmem [resolvable:$true] %s177
      %s179 = sshll.u32 %s4, 4
      %s180 = int_to_ptr.hbm [resolvable:$true] %s179
      %182 = dma.vmem_to_hbm [thread:$0]  %s178, 16, %s180, [#allocation7]
    $region29: #{at_loss.1} parent=1 // pred_fallthru
      _
    // Predicated region
    $region30: #{at_loss.1} parent=1 // pred_check
      _
    $region31: #{at_loss.1} parent=1 // pred_check_branch
      %184 = sbr.rel (0) target = $region33
    $region32: #{at_loss.1} parent=1 // pred_region
      %186 = dma.done [#allocation4], 16
    $region33: #{at_loss.1} parent=1 // pred_fallthru
      _
    // Predicated region
    $region34: #{at_loss.1} parent=1 // pred_check
      _
    $region35: #{at_loss.1} parent=1 // pred_check_branch
      %188 = sbr.rel (0) target = $region37
    $region36: #{at_loss.1} parent=1 // pred_region
      %190 = dma.done [#allocation7], 16
    $region37: #{at_loss.1} parent=1 // pred_fallthru
      _
    %191 = vsyncpa [#allocation3], 1
    %192 = vsyncpa [#allocation4], 1
    %193 = vsyncpa [#allocation7], 1

</llo_original>
